<compile_context>
chip_gen: v7x
topology: tpu7x:2x2x1
jax: 0.10.0
libtpu: 0.0.40
codegen_flags: <defaults>
</compile_context>

<pallas_src>
import jax
import jax.numpy as jnp
from jax.experimental import pallas as pl
from jax.experimental.pallas import tpu as pltpu


# ----------------------------- Pallas kernels ---------------------------------

def encoder_kernel(
    x_t_ref,       # (1, 8, TILE_N)  observed points (features zero-padded to 8, transposed)
    enc_w1t_ref,   # (H, 8)
    enc_b1t_ref,   # (H, 1)
    w_fused_ref,   # (H, H)   (enc_w2 @ dec_wc)^T            -- latent pre-projection
    b_fused_ref,   # (H, 1)   (enc_b2 @ dec_wc + dec_bp)^T
    c_ref,         # (1, H, 1) output: latent in decoder hidden space
    pooled_sc,     # (H, 1) VMEM scratch: running max over N tiles
):
    n = pl.program_id(1)

    @pl.when(n == 0)
    def _():
        pooled_sc[...] = jnp.full(pooled_sc.shape, -jnp.inf, pooled_sc.dtype)

    # (H, 8) x (8, TILE_N) on the MXU, ReLU, running max-pool over the point axis.
    h = jnp.dot(enc_w1t_ref[...], x_t_ref[0],
                preferred_element_type=jnp.float32) + enc_b1t_ref[...]       # (H, TILE_N)
    h = jnp.maximum(h, 0.0)
    pooled_sc[...] = jnp.maximum(pooled_sc[...], jnp.max(h, axis=1, keepdims=True))

    @pl.when(n == pl.num_programs(1) - 1)
    def _():
        c_ref[0] = jnp.dot(w_fused_ref[...], pooled_sc[...],
                           preferred_element_type=jnp.float32) + b_fused_ref[...]  # (H, 1)


def decoder_kernel(
    p_t_ref,       # (1, 8, TILE_T)  query points (features zero-padded to 8, transposed)
    c_ref,         # (1, H, 1)       pre-projected latent for this batch element
    dec_wpt_ref,   # (H, 8)
    dec_wht_ref,   # (H, H)
    dec_bht_ref,   # (H, 1)
    dec_wo_ref,    # (1, H)
    dec_bo_ref,    # (1,)  scalar bias in SMEM
    logits_ref,    # (1, TILE_T) output
    probs_ref,     # (1, TILE_T) output
):
    # K=8 point projection on the MXU; latent (+ folded point bias) broadcast over lanes.
    net = jnp.dot(dec_wpt_ref[...], p_t_ref[0],
                  preferred_element_type=jnp.float32) + c_ref[0]             # (H, TILE_T)
    net = jnp.maximum(net, 0.0)
    hid = jnp.dot(dec_wht_ref[...], net,
                  preferred_element_type=jnp.float32) + dec_bht_ref[...]     # (H, TILE_T)
    hid = jnp.maximum(hid, 0.0)
    # Final H -> 1 projection as an M=1 MXU dot -> lane-dense (1, TILE_T) row.
    logits = jnp.dot(dec_wo_ref[...], hid,
                     preferred_element_type=jnp.float32) + dec_bo_ref[0]     # (1, TILE_T)
    logits_ref[...] = logits
    probs_ref[...] = jax.nn.sigmoid(logits)   # Bernoulli(logits) parameterization


# ------------------------------ JAX wrapper ------------------------------------

def _round_up(x, m):
    return ((x + m - 1) // m) * m


def conv_onet_forward(p, inputs, params, *, tile_t=1024, tile_n=2048):
    """Mirrors ConvolutionalOccupancyNetwork.forward: encode_inputs -> decode -> Bernoulli."""
    f32 = jnp.float32
    B, N, din = inputs.shape
    _, T, _ = p.shape
    H = params["dec_wh"].shape[0]
    assert din <= 8

    # ---- query-axis tiling (lane axis) ----
    tile_t_eff = _round_up(min(tile_t, _round_up(T, 128)), 128)
    t_pad = _round_up(T, tile_t_eff)
    num_t = t_pad // tile_t_eff

    # ---- point-cloud tiling ----
    if N <= tile_n:
        tile_n_eff, n_pad = N, N
    else:
        tile_n_eff = _round_up(tile_n, 128)
        n_pad = _round_up(N, tile_n_eff)
    num_n = n_pad // tile_n_eff

    # ---- host-side layout plumbing (done once): feature dim padded to 8 for MXU K=8 dots ----
    def pad_feat_and_transpose(a, n_total, edge):
        a = a.astype(f32)
        a = jnp.pad(a, ((0, 0), (0, 0), (0, 8 - din)))                       # zero-pad features
        if n_total > a.shape[1]:
            mode = "edge" if edge else "constant"                            # edge: max-pool safe
            a = jnp.pad(a, ((0, 0), (0, n_total - a.shape[1]), (0, 0)), mode=mode)
        return jnp.transpose(a, (0, 2, 1))                                   # (B, 8, n_total)

    x_t = pad_feat_and_transpose(inputs, n_pad, edge=True)
    p_t = pad_feat_and_transpose(p, t_pad, edge=False)

    hp = jax.lax.Precision.HIGHEST
    enc_w1t = jnp.pad(params["enc_w1"].astype(f32).T, ((0, 0), (0, 8 - din)))   # (H, 8)
    enc_b1t = params["enc_b1"].astype(f32).reshape(-1, 1)                       # (H, 1)
    # Fold enc_w2, enc_b2, dec_wc and dec_bp (no nonlinearity between them) into one mat/bias.
    w_fused = jnp.einsum("hc,ck->kh", params["enc_w2"].astype(f32),
                         params["dec_wc"].astype(f32), precision=hp)            # (H, H)
    b_fused = (jnp.einsum("oc,ck->k", params["enc_b2"].astype(f32),
                          params["dec_wc"].astype(f32), precision=hp)
               + params["dec_bp"].astype(f32).reshape(-1)).reshape(-1, 1)       # (H, 1)
    dec_wpt = jnp.pad(params["dec_wp"].astype(f32).T, ((0, 0), (0, 8 - din)))   # (H, 8)
    dec_wht = params["dec_wh"].astype(f32).T                                    # (H, H)
    dec_bht = params["dec_bh"].astype(f32).reshape(-1, 1)                       # (H, 1)
    dec_wo_row = params["dec_wo"].astype(f32).reshape(1, -1)                    # (1, H)
    dec_bo = params["dec_bo"].astype(f32).reshape(1)                            # (1,) -> SMEM

    const = lambda shape: pl.BlockSpec(shape, lambda b, i: (0, 0))

    # ---------------- encoder pass: latent pre-projected into decoder hidden space ------------
    c_proj = pl.pallas_call(
        encoder_kernel,
        out_shape=jax.ShapeDtypeStruct((B, H, 1), f32),
        grid=(B, num_n),
        in_specs=[
            pl.BlockSpec((1, 8, tile_n_eff), lambda b, n: (b, 0, n)),   # x_t (per batch, N tile)
            const((H, 8)), const((H, 1)),                               # enc_w1t, enc_b1t
            const((H, H)), const((H, 1)),                               # w_fused, b_fused
        ],
        out_specs=pl.BlockSpec((1, H, 1), lambda b, n: (b, 0, 0)),
        scratch_shapes=[pltpu.VMEM((H, 1), f32)],
        compiler_params=pltpu.CompilerParams(
            dimension_semantics=("parallel", "arbitrary")),
    )(x_t, enc_w1t, enc_b1t, w_fused, b_fused)

    # ---------------- decoder pass: fully parallel over (batch, query tile) -------------------
    logits_pad, probs_pad = pl.pallas_call(
        decoder_kernel,
        out_shape=(jax.ShapeDtypeStruct((B, t_pad), f32),
                   jax.ShapeDtypeStruct((B, t_pad), f32)),
        grid=(B, num_t),
        in_specs=[
            pl.BlockSpec((1, 8, tile_t_eff), lambda b, t: (b, 0, t)),   # p_t (per query tile)
            pl.BlockSpec((1, H, 1), lambda b, t: (b, 0, 0)),            # latent (per batch)
            const((H, 8)),                                              # dec_wpt
            const((H, H)), const((H, 1)),                               # dec_wht, dec_bht
            const((1, H)),                                              # dec_wo (row)
            pl.BlockSpec(memory_space=pltpu.MemorySpace.SMEM),          # dec_bo scalar
        ],
        out_specs=(
            pl.BlockSpec((1, tile_t_eff), lambda b, t: (b, t)),         # logits (lane-dense)
            pl.BlockSpec((1, tile_t_eff), lambda b, t: (b, t)),         # probs  (lane-dense)
        ),
        compiler_params=pltpu.CompilerParams(
            dimension_semantics=("parallel", "parallel")),
    )(p_t, c_proj, dec_wpt, dec_wht, dec_bht, dec_wo_row, dec_bo)

    return {"logits": logits_pad[:, :T], "probs": probs_pad[:, :T]}


# ------------------------------ reference & params ------------------------------

def conv_onet_reference(p, inputs, params):
    """Pure-JAX reference (full f32 precision) for correctness checking."""
    hp = jax.lax.Precision.HIGHEST
    h = jnp.maximum(
        jnp.einsum("bnd,dh->bnh", inputs, params["enc_w1"], precision=hp) + params["enc_b1"], 0.0)
    pooled = jnp.max(h, axis=1)                                               # (B, H)
    c = jnp.einsum("bh,hc->bc", pooled, params["enc_w2"], precision=hp) + params["enc_b2"]
    net = jnp.einsum("btd,dh->bth", p, params["dec_wp"], precision=hp) + params["dec_bp"]
    net = net + jnp.einsum("bc,ch->bh", c, params["dec_wc"], precision=hp)[:, None, :]
    net = jnp.maximum(net, 0.0)
    hh = jnp.maximum(
        jnp.einsum("bth,hk->btk", net, params["dec_wh"], precision=hp) + params["dec_bh"], 0.0)
    logits = (jnp.einsum("bth,ho->bto", hh, params["dec_wo"], precision=hp) + params["dec_bo"])[..., 0]
    return logits


def init_params(key, din=3, hidden=128, c_dim=128):
    ks = jax.random.split(key, 6)

    def lin(k, fan_in, shape):
        return (jax.random.normal(k, shape, jnp.float32) / jnp.sqrt(fan_in)).astype(jnp.float32)

    return {
        "enc_w1": lin(ks[0], din, (din, hidden)),
        "enc_b1": jnp.zeros((1, hidden), jnp.float32),
        "enc_w2": lin(ks[1], hidden, (hidden, c_dim)),
        "enc_b2": jnp.zeros((1, c_dim), jnp.float32),
        "dec_wp": lin(ks[2], din, (din, hidden)),
        "dec_bp": jnp.zeros((1, hidden), jnp.float32),
        "dec_wc": lin(ks[3], c_dim, (c_dim, hidden)),
        "dec_wh": lin(ks[4], hidden, (hidden, hidden)),
        "dec_bh": jnp.zeros((1, hidden), jnp.float32),
        "dec_wo": lin(ks[5], hidden, (hidden, 1)),
        "dec_bo": jnp.zeros((1, 1), jnp.float32),
    }


if __name__ == "__main__":
    # Small but (8,128)-aligned demo shapes: H = C = 128; query tile auto-shrinks to padded T.
    B, N, T, DIN, HID, CDIM = 2, 128, 512, 3, 128, 128

    key = jax.random.PRNGKey(0)
    k_in, k_p, k_par = jax.random.split(key, 3)
    inputs = jax.random.normal(k_in, (B, N, DIN), jnp.float32)               # observed point cloud
    p = jax.random.uniform(k_p, (B, T, DIN), jnp.float32, -0.5, 0.5)         # query points
    params = init_params(k_par, DIN, HID, CDIM)

    out = conv_onet_forward(p, inputs, params, tile_t=1024)
    jax.block_until_ready(out["logits"])

    ref_logits = conv_onet_reference(p, inputs, params)
    assert out["logits"].shape == (B, T)
    assert out["probs"].shape == (B, T)
    # Tolerance slightly looser than before: host-side weight fusion reassociates low-order bits.
    assert jnp.allclose(out["logits"], ref_logits, atol=5e-3, rtol=5e-3), "logits mismatch vs reference"
    assert jnp.allclose(out["probs"], jax.nn.sigmoid(ref_logits), atol=5e-3, rtol=5e-3), "probs mismatch"
    assert jnp.all(jnp.isfinite(out["probs"]))

    print("KERNEL_OK")
</pallas_src>

<mosaic_0001>
module attributes {stable_mosaic.version = 11 : i64} {
  func.func @encoder_kernel(%arg0: i32, %arg1: i32, %arg2: memref<1x8x128xf32, #tpu.memory_space<vmem>>, %arg3: memref<128x8xf32, #tpu.memory_space<vmem>>, %arg4: memref<128x1xf32, #tpu.memory_space<vmem>>, %arg5: memref<128x128xf32, #tpu.memory_space<vmem>>, %arg6: memref<128x1xf32, #tpu.memory_space<vmem>>, %arg7: memref<1x128x1xf32, #tpu.memory_space<vmem>>, %arg8: memref<128x1xf32, #tpu.memory_space<vmem>>) attributes {dimension_semantics = [#tpu.dimension_semantics<parallel>, #tpu.dimension_semantics<arbitrary>], iteration_bounds = array<i64: 2, 1>, scalar_prefetch = 0 : i64, scratch_operands = 1 : i64, tpu.core_type = #tpu.core_type<tc>, window_params = [{transform_indices = @transform_0, window_bounds = array<i64: 1, 8, 128>}, {pipeline_mode = #tpu.pipeline_mode<synchronous>, transform_indices = @transform_1, window_bounds = array<i64: 128, 8>}, {pipeline_mode = #tpu.pipeline_mode<synchronous>, transform_indices = @transform_2, window_bounds = array<i64: 128, 1>}, {pipeline_mode = #tpu.pipeline_mode<synchronous>, transform_indices = @transform_3, window_bounds = array<i64: 128, 128>}, {pipeline_mode = #tpu.pipeline_mode<synchronous>, transform_indices = @transform_4, window_bounds = array<i64: 128, 1>}, {transform_indices = @transform_5, window_bounds = array<i64: 1, 128, 1>}]} {
    %c0_i32 = arith.constant 0 : i32
    %0 = arith.cmpi eq, %arg1, %c0_i32 : i32
    %1 = arith.extui %0 : i1 to i32
    %c0_i32_0 = arith.constant 0 : i32
    %2 = arith.cmpi ne, %1, %c0_i32_0 : i32
    scf.if %2 {
      %cst_15 = arith.constant 0xFF800000 : f32
      %20 = vector.broadcast %cst_15 : f32 to vector<128x1xf32>
      %c0_16 = arith.constant 0 : index
      %c0_17 = arith.constant 0 : index
      %21 = vector.load %arg8[%c0_16, %c0_17] : memref<128x1xf32, #tpu.memory_space<vmem>>, vector<128x1xf32>
      tpu.vector_store %arg8[%c0_16, %c0_17], %20 {strides = array<i32>} : memref<128x1xf32, #tpu.memory_space<vmem>>, vector<128x1xf32>,
    } else {
    }
    %c0 = arith.constant 0 : index
    %c0_1 = arith.constant 0 : index
    %3 = vector.load %arg3[%c0, %c0_1] : memref<128x8xf32, #tpu.memory_space<vmem>>, vector<128x8xf32>
    %c0_2 = arith.constant 0 : index
    %c0_3 = arith.constant 0 : index
    %c0_4 = arith.constant 0 : index
    %4 = vector.load %arg2[%c0_2, %c0_3, %c0_4] : memref<1x8x128xf32, #tpu.memory_space<vmem>>, vector<1x8x128xf32>
    %5 = vector.shape_cast %4 : vector<1x8x128xf32> to vector<8x128xf32>
    %cst = arith.constant dense<0.000000e+00> : vector<128x128xf32>
    %6 = tpu.matmul %3, %5, %cst {dimension_numbers = #tpu.dot_dimension_numbers<[1], [0], [0], [1], [0, 0, 1, 1], [], []>} : vector<128x8xf32>, vector<8x128xf32>, vector<128x128xf32> -> vector<128x128xf32>
    %c0_5 = arith.constant 0 : index
    %c0_6 = arith.constant 0 : index
    %7 = vector.load %arg4[%c0_5, %c0_6] : memref<128x1xf32, #tpu.memory_space<vmem>>, vector<128x1xf32>
    %8 = vector.broadcast %7 : vector<128x1xf32> to vector<128x128xf32>
    %9 = arith.addf %6, %8 : vector<128x128xf32>
    %cst_7 = arith.constant 0.000000e+00 : f32
    %10 = vector.broadcast %cst_7 : f32 to vector<128x128xf32>
    %11 = arith.maximumf %9, %10 : vector<128x128xf32>
    %c0_8 = arith.constant 0 : index
    %c0_9 = arith.constant 0 : index
    %12 = vector.load %arg8[%c0_8, %c0_9] : memref<128x1xf32, #tpu.memory_space<vmem>>, vector<128x1xf32>
    %cst_10 = arith.constant dense<0xFF800000> : vector<128xf32>
    %13 = vector.multi_reduction <maximumf>, %11, %cst_10 [1] : vector<128x128xf32> to vector<128xf32>
    %14 = vector.shape_cast %13 : vector<128xf32> to vector<128x1xf32>
    %15 = arith.maximumf %12, %14 : vector<128x1xf32>
    %c0_11 = arith.constant 0 : index
    %c0_12 = arith.constant 0 : index
    %16 = vector.load %arg8[%c0_11, %c0_12] : memref<128x1xf32, #tpu.memory_space<vmem>>, vector<128x1xf32>
    tpu.vector_store %arg8[%c0_11, %c0_12], %15 {strides = array<i32>} : memref<128x1xf32, #tpu.memory_space<vmem>>, vector<128x1xf32>,
    %c0_i32_13 = arith.constant 0 : i32
    %17 = arith.cmpi eq, %arg1, %c0_i32_13 : i32
    %18 = arith.extui %17 : i1 to i32
    %c0_i32_14 = arith.constant 0 : i32
    %19 = arith.cmpi ne, %18, %c0_i32_14 : i32
    scf.if %19 {
      %c0_15 = arith.constant 0 : index
      %c0_16 = arith.constant 0 : index
      %20 = vector.load %arg5[%c0_15, %c0_16] : memref<128x128xf32, #tpu.memory_space<vmem>>, vector<128x128xf32>
      %c0_17 = arith.constant 0 : index
      %c0_18 = arith.constant 0 : index
      %21 = vector.load %arg8[%c0_17, %c0_18] : memref<128x1xf32, #tpu.memory_space<vmem>>, vector<128x1xf32>
      %cst_19 = arith.constant dense<0.000000e+00> : vector<128x1xf32>
      %22 = tpu.matmul %20, %21, %cst_19 {dimension_numbers = #tpu.dot_dimension_numbers<[1], [0], [0], [1], [0, 0, 1, 1], [], []>} : vector<128x128xf32>, vector<128x1xf32>, vector<128x1xf32> -> vector<128x1xf32>
      %c0_20 = arith.constant 0 : index
      %c0_21 = arith.constant 0 : index
      %23 = vector.load %arg6[%c0_20, %c0_21] : memref<128x1xf32, #tpu.memory_space<vmem>>, vector<128x1xf32>
      %24 = arith.addf %22, %23 : vector<128x1xf32>
      %c0_22 = arith.constant 0 : index
      %c0_23 = arith.constant 0 : index
      %c0_24 = arith.constant 0 : index
      %25 = vector.load %arg7[%c0_22, %c0_23, %c0_24] : memref<1x128x1xf32, #tpu.memory_space<vmem>>, vector<1x128x1xf32>
      %26 = vector.shape_cast %25 : vector<1x128x1xf32> to vector<128x1xf32>
      %27 = vector.shape_cast %24 : vector<128x1xf32> to vector<1x128x1xf32>
      tpu.vector_store %arg7[%c0_22, %c0_23, %c0_24], %27 {strides = array<i32>} : memref<1x128x1xf32, #tpu.memory_space<vmem>>, vector<1x128x1xf32>,
    } else {
    }
    return
  }
  func.func @transform_0(%arg0: i32, %arg1: i32) -> (i32, i32, i32) {
    %c0_i32 = arith.constant 0 : i32
    %c0_i32_0 = arith.constant 0 : i32
    return %arg0, %c0_i32, %arg1 : i32, i32, i32
  }
  func.func @transform_1(%arg0: i32, %arg1: i32) -> (i32, i32) {
    %c0_i32 = arith.constant 0 : i32
    %c0_i32_0 = arith.constant 0 : i32
    %c0_i32_1 = arith.constant 0 : i32
    return %c0_i32, %c0_i32_0 : i32, i32
  }
  func.func @transform_2(%arg0: i32, %arg1: i32) -> (i32, i32) {
    %c0_i32 = arith.constant 0 : i32
    %c0_i32_0 = arith.constant 0 : i32
    %c0_i32_1 = arith.constant 0 : i32
    return %c0_i32, %c0_i32_0 : i32, i32
  }
  func.func @transform_3(%arg0: i32, %arg1: i32) -> (i32, i32) {
    %c0_i32 = arith.constant 0 : i32
    %c0_i32_0 = arith.constant 0 : i32
    %c0_i32_1 = arith.constant 0 : i32
    return %c0_i32, %c0_i32_0 : i32, i32
  }
  func.func @transform_4(%arg0: i32, %arg1: i32) -> (i32, i32) {
    %c0_i32 = arith.constant 0 : i32
    %c0_i32_0 = arith.constant 0 : i32
    %c0_i32_1 = arith.constant 0 : i32
    return %c0_i32, %c0_i32_0 : i32, i32
  }
  func.func @transform_5(%arg0: i32, %arg1: i32) -> (i32, i32, i32) {
    %c0_i32 = arith.constant 0 : i32
    %c0_i32_0 = arith.constant 0 : i32
    %c0_i32_1 = arith.constant 0 : i32
    return %arg0, %c0_i32, %c0_i32_0 : i32, i32, i32
  }
}

</mosaic_0001>

<llo_original>
// kernel: tpu_custom_call.1
$region0: #{tpu_custom_call.1}
  #allocation0 [shape = 'u32[]', space=smem, size = 0x4, offset = 0x4, fixed_abs, tag = 'smem constant byte address 0x4 - core index']
  #allocation1 [shape = 'u32[144,128]{1,0:T(1,128)}', space=vmem, size = 0x12000, scoped, tag = 'internal scratch']
  #allocation2 [shape = 'f32[128,1]{1,0:T(8,128)}', space=vmem, size = 0x10000, scoped, tag = 'scratch operand']
  %s0 = inlined_call_operand.vmem [shape: f32[2,8,128], index: 0, kind: input, shape index: {}]
  %s1 = inlined_call_operand.vmem [shape: f32[128,8], index: 1, kind: input, shape index: {}]
  %s2 = inlined_call_operand.vmem [shape: f32[128,1], index: 2, kind: input, shape index: {}]
  %s3 = inlined_call_operand.vmem [shape: f32[128,128], index: 3, kind: input, shape index: {}]
  %s4 = inlined_call_operand.vmem [shape: f32[128,1], index: 4, kind: input, shape index: {}]
  %s5 = inlined_call_operand.vmem [shape: f32[2,128,1], index: 5, kind: output, shape index: {}]
  %s6 = sld [smem:[#allocation0]]
  $region61: #{tpu_custom_call.1} parent=0
    _
  %s8 = ssub.s32 1, %s6
  %s9 = scalar_select 0, %s8, %s6
  loop: start=0, step=1, limit=4
  $region2: #{tpu_custom_call.1} parent=0 // loop_pre_header
    _
  $region3: #{tpu_custom_call.1} parent=0 // loop_header
    %s11 = sphi 0, %s15
    %p12 = scmp.ge.s32.totalorder %s11, 4
    %s18 = sphi 0, %s30
    %s19 = sphi 0, %s26
    %s20 = sphi 0, %s18
    %s21 = sphi 0, %s19
    %s22 = sphi 0, %s20
    %s23 = sphi 0, %s21
    %s35 = sphi 0, %s37
    %s38 = sphi 0, %s35
    %s39 = sphi 0, %s38
    %s55 = sphi 0, %s39
    %s59 = sphi 0, %s59
    %s61 = sphi 0, %s59
    %s62 = sphi 0, %s61
    %s76 = sphi 0, %s62
    %s80 = sphi 0, %s80
    %s82 = sphi 0, %s80
    %s83 = sphi 0, %s82
    %s97 = sphi 0, %s83
    %s101 = sphi 0, %s101
    %s103 = sphi 0, %s101
    %s104 = sphi 0, %s103
    %s118 = sphi 0, %s104
    %s122 = sphi 0, %s122
    %s124 = sphi 0, %s122
    %s125 = sphi 0, %s124
    %s139 = sphi 0, %s125
    %s145 = sphi 0, %s147
    %s148 = sphi 0, %s145
    %s149 = sphi 0, %s148
    %s165 = sphi 0, %s149
  $region4: #{tpu_custom_call.1} parent=0 // loop_header_branch
    %14 = sbr.rel (%p12) target = $region8
  $region5: #{tpu_custom_call.1} parent=0 // loop_body
    %s16 = ssub.s32 %s11, 1
    %s17 = ssub.s32 %s11, 2
    %s24 = sadd.s32 1, %s19
    %p25 = scmp.ge.s32.totalorder %s24, 1
    %s26 = scalar_select %p25, 0, %s24
    %s27 = sadd.s32 1, %s18
    %s28 = scalar_select %p25, %s27, %s18
    %p29 = scmp.ge.s32.totalorder %s28, 2
    %s30 = scalar_select %p29, 0, %s28
    %s31 = ssub.s32 %s18, %s30
    %s32 = ssub.s32 %s19, %s26
    %s33 = sor.u32 %s31, %s32
    %p34 = scmp.eq.s32.totalorder %s33, 0
    %s36 = sadd.s32 %s35, 1
    %s37 = scalar_select %p34, %s35, %s36
    %p40 = pneg %p34
    %p41 = scmp.eq.s32.totalorder %s11, 1
    %p42 = por %p40, %p41
    %p43 = scmp.ne.s32.totalorder %s35, %s38
    %p44 = scmp.eq.s32.totalorder %s11, 0
    %p45 = por %p43, %p44
    %p46 = scmp.ne.s32.totalorder %s35, %s38
    %p47 = scmp.eq.s32.totalorder %s16, 1
    %p48 = por %p46, %p47
    %p49 = scmp.ne.s32.totalorder %s38, %s39
    %p50 = scmp.eq.s32.totalorder %s16, 0
    %p51 = por %p49, %p50
    %p52 = scmp.ne.s32.totalorder %s38, %s39
    %p53 = scmp.eq.s32.totalorder %s17, 1
    %p54 = por %p52, %p53
    %p56 = scmp.ne.s32.totalorder %s39, %s55
    %p57 = scmp.eq.s32.totalorder %s17, 0
    %p58 = por %p56, %p57
    %s60 = sadd.s32 %s59, 1
    %p63 = scmp.eq.s32.totalorder %s11, 1
    %p64 = scmp.ne.s32.totalorder %s59, %s61
    %p65 = scmp.eq.s32.totalorder %s11, 0
    %p66 = por %p64, %p65
    %p67 = scmp.ne.s32.totalorder %s59, %s61
    %p68 = scmp.eq.s32.totalorder %s16, 1
    %p69 = por %p67, %p68
    %p70 = scmp.ne.s32.totalorder %s61, %s62
    %p71 = scmp.eq.s32.totalorder %s16, 0
    %p72 = por %p70, %p71
    %p73 = scmp.ne.s32.totalorder %s61, %s62
    %p74 = scmp.eq.s32.totalorder %s17, 1
    %p75 = por %p73, %p74
    %p77 = scmp.ne.s32.totalorder %s62, %s76
    %p78 = scmp.eq.s32.totalorder %s17, 0
    %p79 = por %p77, %p78
    %s81 = sadd.s32 %s80, 1
    %p84 = scmp.eq.s32.totalorder %s11, 1
    %p85 = scmp.ne.s32.totalorder %s80, %s82
    %p86 = scmp.eq.s32.totalorder %s11, 0
    %p87 = por %p85, %p86
    %p88 = scmp.ne.s32.totalorder %s80, %s82
    %p89 = scmp.eq.s32.totalorder %s16, 1
    %p90 = por %p88, %p89
    %p91 = scmp.ne.s32.totalorder %s82, %s83
    %p92 = scmp.eq.s32.totalorder %s16, 0
    %p93 = por %p91, %p92
    %p94 = scmp.ne.s32.totalorder %s82, %s83
    %p95 = scmp.eq.s32.totalorder %s17, 1
    %p96 = por %p94, %p95
    %p98 = scmp.ne.s32.totalorder %s83, %s97
    %p99 = scmp.eq.s32.totalorder %s17, 0
    %p100 = por %p98, %p99
    %s102 = sadd.s32 %s101, 1
    %p105 = scmp.eq.s32.totalorder %s11, 1
    %p106 = scmp.ne.s32.totalorder %s101, %s103
    %p107 = scmp.eq.s32.totalorder %s11, 0
    %p108 = por %p106, %p107
    %p109 = scmp.ne.s32.totalorder %s101, %s103
    %p110 = scmp.eq.s32.totalorder %s16, 1
    %p111 = por %p109, %p110
    %p112 = scmp.ne.s32.totalorder %s103, %s104
    %p113 = scmp.eq.s32.totalorder %s16, 0
    %p114 = por %p112, %p113
    %p115 = scmp.ne.s32.totalorder %s103, %s104
    %p116 = scmp.eq.s32.totalorder %s17, 1
    %p117 = por %p115, %p116
    %p119 = scmp.ne.s32.totalorder %s104, %s118
    %p120 = scmp.eq.s32.totalorder %s17, 0
    %p121 = por %p119, %p120
    %s123 = sadd.s32 %s122, 1
    %p126 = scmp.eq.s32.totalorder %s11, 1
    %p127 = scmp.ne.s32.totalorder %s122, %s124
    %p128 = scmp.eq.s32.totalorder %s11, 0
    %p129 = por %p127, %p128
    %p130 = scmp.ne.s32.totalorder %s122, %s124
    %p131 = scmp.eq.s32.totalorder %s16, 1
    %p132 = por %p130, %p131
    %p133 = scmp.ne.s32.totalorder %s124, %s125
    %p134 = scmp.eq.s32.totalorder %s16, 0
    %p135 = por %p133, %p134
    %p136 = scmp.ne.s32.totalorder %s124, %s125
    %p137 = scmp.eq.s32.totalorder %s17, 1
    %p138 = por %p136, %p137
    %p140 = scmp.ne.s32.totalorder %s125, %s139
    %p141 = scmp.eq.s32.totalorder %s17, 0
    %p142 = por %p140, %p141
    %s143 = ssub.s32 %s18, %s30
    %p144 = scmp.eq.s32.totalorder %s143, 0
    %s146 = sadd.s32 %s145, 1
    %s147 = scalar_select %p144, %s145, %s146
    %p150 = pneg %p144
    %p151 = scmp.eq.s32.totalorder %s11, 1
    %p152 = por %p150, %p151
    %p153 = scmp.ne.s32.totalorder %s145, %s148
    %p154 = scmp.eq.s32.totalorder %s11, 0
    %p155 = por %p153, %p154
    %p156 = scmp.ne.s32.totalorder %s145, %s148
    %p157 = scmp.eq.s32.totalorder %s16, 1
    %p158 = por %p156, %p157
    %p159 = scmp.ne.s32.totalorder %s148, %s149
    %p160 = scmp.eq.s32.totalorder %s16, 0
    %p161 = por %p159, %p160
    %p162 = scmp.ne.s32.totalorder %s148, %s149
    %p163 = scmp.eq.s32.totalorder %s17, 1
    %p164 = por %p162, %p163
    %p166 = scmp.ne.s32.totalorder %s149, %s165
    %p167 = scmp.eq.s32.totalorder %s17, 0
    %p168 = por %p166, %p167
    %p169 = scmp.le.s32.totalorder 1, %s11
    %p170 = scmp.lt.s32.totalorder %s11, 3
    %p171 = pnand %p169, %p170
    %p172 = pneg %p171
    // Predicated region
    $region9: #{tpu_custom_call.1} parent=5 // pred_check
      _
    $region10: #{tpu_custom_call.1} parent=5 // pred_check_branch
      %174 = sbr.rel (%p171) target = $region12
    $region11: #{tpu_custom_call.1} parent=5 // pred_region
      %s175 = ssub.s32 %s11, 1
      // Predicated region
      $region13: #{tpu_custom_call.1} parent=11 // pred_check
        %p176 = pneg %p72
      $region14: #{tpu_custom_call.1} parent=11 // pred_check_branch
        %178 = sbr.rel (%p176) target = $region16
      $region15: #{tpu_custom_call.1} parent=11 // pred_region
        _
      $region16: #{tpu_custom_call.1} parent=11 // pred_fallthru
        _
      // Predicated region
      $region17: #{tpu_custom_call.1} parent=11 // pred_check
        %p179 = pneg %p93
      $region18: #{tpu_custom_call.1} parent=11 // pred_check_branch
        %181 = sbr.rel (%p179) target = $region20
      $region19: #{tpu_custom_call.1} parent=11 // pred_region
        _
      $region20: #{tpu_custom_call.1} parent=11 // pred_fallthru
        _
      // Predicated region
      $region21: #{tpu_custom_call.1} parent=11 // pred_check
        %p182 = pneg %p114
      $region22: #{tpu_custom_call.1} parent=11 // pred_check_branch
        %184 = sbr.rel (%p182) target = $region24
      $region23: #{tpu_custom_call.1} parent=11 // pred_region
        _
      $region24: #{tpu_custom_call.1} parent=11 // pred_fallthru
        _
      // Predicated region
      $region25: #{tpu_custom_call.1} parent=11 // pred_check
        %p185 = pneg %p135
      $region26: #{tpu_custom_call.1} parent=11 // pred_check_branch
        %187 = sbr.rel (%p185) target = $region28
      $region27: #{tpu_custom_call.1} parent=11 // pred_region
        _
      $region28: #{tpu_custom_call.1} parent=11 // pred_fallthru
        _
    $region12: #{tpu_custom_call.1} parent=5 // pred_fallthru
      _
    %p188 = scmp.lt.s32.totalorder %s11, 2
    // Predicated region
    $region29: #{tpu_custom_call.1} parent=5 // pred_check
      %p189 = pneg %p188
    $region30: #{tpu_custom_call.1} parent=5 // pred_check_branch
      %191 = sbr.rel (%p189) target = $region32
    $region31: #{tpu_custom_call.1} parent=5 // pred_region
      // Predicated region
      $region33: #{tpu_custom_call.1} parent=31 // pred_check
        %p192 = pneg %p45
      $region34: #{tpu_custom_call.1} parent=31 // pred_check_branch
        %194 = sbr.rel (%p192) target = $region36
      $region35: #{tpu_custom_call.1} parent=31 // pred_region
        %p195 = scmp.lt.s32.totalorder %s18, 1
        %s196 = scalar_select %p195, %s18, 1
        %p197 = scmp.lt.s32.totalorder %s19, 0
        %s198 = scalar_select %p197, %s19, 0
        %s199 = sadd.s32 %s198, %s196
        %s200 = smul.addr %s199, 8
        %s201 = scalar_lea.vmem %s0, %s200
      $region36: #{tpu_custom_call.1} parent=31 // pred_fallthru
        _
    $region32: #{tpu_custom_call.1} parent=5 // pred_fallthru
      _
    %p202 = scmp.le.s32.totalorder 1, %s11
    %p203 = scmp.lt.s32.totalorder %s11, 3
    %p204 = pnand %p202, %p203
    %p205 = pneg %p204
    // Predicated region
    $region37: #{tpu_custom_call.1} parent=5 // pred_check
      _
    $region38: #{tpu_custom_call.1} parent=5 // pred_check_branch
      %207 = sbr.rel (%p204) target = $region40
    $region39: #{tpu_custom_call.1} parent=5 // pred_region
      %s208 = ssub.s32 %s11, 1
      %p209 = scmp.lt.s32.totalorder %s20, 1
      %s210 = scalar_select %p209, %s20, 1
      %p211 = scmp.lt.s32.totalorder %s21, 0
      %s212 = scalar_select %p211, %s21, 0
      %s213 = sadd.s32 %s212, %s210
      %s214 = smul.addr %s213, 8
      %s215 = scalar_lea.vmem %s0, %s214
      %p216 = pneg %p51
      %p217 = pneg %p48
      %p218 = pneg %p72
      %p219 = pneg %p69
      %p220 = pneg %p93
      %p221 = pneg %p90
      %p222 = pneg %p114
      %p223 = pneg %p111
      %p224 = pneg %p135
      %p225 = pneg %p132
      %p226 = pneg %p161
      %p227 = pneg %p158
      %p228 = scmp.lt.s32.totalorder %s20, 1
      %s229 = scalar_select %p228, %s20, 1
      %s230 = smul.addr %s229, 16
      %s231 = smul.addr %s230, 8
      %s232 = scalar_lea.vmem %s5, %s231
      %p233 = scmp.lt.s32.totalorder %s20, 1
      %s234 = scalar_select %p233, %s20, 1
      %p235 = scmp.lt.s32.totalorder %s21, 0
      %s236 = scalar_select %p235, %s21, 0
      %s237 = sadd.s32 %s236, %s234
      %s238 = smul.addr %s237, 8
      %s239 = scalar_lea.vmem %s0, %s238
      %p240 = scmp.lt.s32.totalorder %s20, 1
      %s241 = scalar_select %p240, %s20, 1
      %s242 = smul.addr %s241, 16
      %s243 = smul.addr %s242, 8
      %s244 = scalar_lea.vmem %s5, %s243
      %p245 = scmp.eq.s32.totalorder %s21, 0
      // Predicated region
      $region41: #{tpu_custom_call.1} parent=39 // pred_check
        %p246 = pneg %p245
      $region42: #{tpu_custom_call.1} parent=39 // pred_check_branch
        %248 = sbr.rel (%p246) target = $region44
      $region43: #{tpu_custom_call.1} parent=39 // pred_region
        %vm249 = vcmask 7168
        %250 = vst.msk [vmem:[#allocation2] sm:$0xff] %vm249, -inf
        %251 = vst.msk [vmem:[#allocation2 + $0x8] sm:$0xff] %vm249, -inf
        %252 = vst.msk [vmem:[#allocation2 + $0x10] sm:$0xff] %vm249, -inf
        %253 = vst.msk [vmem:[#allocation2 + $0x18] sm:$0xff] %vm249, -inf
        %254 = vst.msk [vmem:[#allocation2 + $0x20] sm:$0xff] %vm249, -inf
        %255 = vst.msk [vmem:[#allocation2 + $0x28] sm:$0xff] %vm249, -inf
        %256 = vst.msk [vmem:[#allocation2 + $0x30] sm:$0xff] %vm249, -inf
        %257 = vst.msk [vmem:[#allocation2 + $0x38] sm:$0xff] %vm249, -inf
        %258 = vst.msk [vmem:[#allocation2 + $0x40] sm:$0xff] %vm249, -inf
        %259 = vst.msk [vmem:[#allocation2 + $0x48] sm:$0xff] %vm249, -inf
        %260 = vst.msk [vmem:[#allocation2 + $0x50] sm:$0xff] %vm249, -inf
        %261 = vst.msk [vmem:[#allocation2 + $0x58] sm:$0xff] %vm249, -inf
        %262 = vst.msk [vmem:[#allocation2 + $0x60] sm:$0xff] %vm249, -inf
        %263 = vst.msk [vmem:[#allocation2 + $0x68] sm:$0xff] %vm249, -inf
        %264 = vst.msk [vmem:[#allocation2 + $0x70] sm:$0xff] %vm249, -inf
        %265 = vst.msk [vmem:[#allocation2 + $0x78] sm:$0xff] %vm249, -inf
      $region44: #{tpu_custom_call.1} parent=39 // pred_fallthru
        _
      %v266 = vld [vmem:[%s1] sm:$0xff]
      %v267 = vld [vmem:[%s1 + $0x8] sm:$0xff]
      %v268 = vld [vmem:[%s1 + $0x10] sm:$0xff]
      %v269 = vld [vmem:[%s1 + $0x18] sm:$0xff]
      %v270 = vld [vmem:[%s1 + $0x20] sm:$0xff]
      %v271 = vld [vmem:[%s1 + $0x28] sm:$0xff]
      %v272 = vld [vmem:[%s1 + $0x30] sm:$0xff]
      %v273 = vld [vmem:[%s1 + $0x38] sm:$0xff]
      %v274 = vld [vmem:[%s1 + $0x40] sm:$0xff]
      %v275 = vld [vmem:[%s1 + $0x48] sm:$0xff]
      %v276 = vld [vmem:[%s1 + $0x50] sm:$0xff]
      %v277 = vld [vmem:[%s1 + $0x58] sm:$0xff]
      %v278 = vld [vmem:[%s1 + $0x60] sm:$0xff]
      %v279 = vld [vmem:[%s1 + $0x68] sm:$0xff]
      %v280 = vld [vmem:[%s1 + $0x70] sm:$0xff]
      %v281 = vld [vmem:[%s1 + $0x78] sm:$0xff]
      %v282 = vld [vmem:[%s239] sm:$0xff]
      %v283 = vld [vmem:[%s2] sm:$0xff]
      %v284 = vld [vmem:[%s2 + $0x8] sm:$0xff]
      %v285 = vld [vmem:[%s2 + $0x10] sm:$0xff]
      %v286 = vld [vmem:[%s2 + $0x18] sm:$0xff]
      %v287 = vld [vmem:[%s2 + $0x20] sm:$0xff]
      %v288 = vld [vmem:[%s2 + $0x28] sm:$0xff]
      %v289 = vld [vmem:[%s2 + $0x30] sm:$0xff]
      %v290 = vld [vmem:[%s2 + $0x38] sm:$0xff]
      %v291 = vld [vmem:[%s2 + $0x40] sm:$0xff]
      %v292 = vld [vmem:[%s2 + $0x48] sm:$0xff]
      %v293 = vld [vmem:[%s2 + $0x50] sm:$0xff]
      %v294 = vld [vmem:[%s2 + $0x58] sm:$0xff]
      %v295 = vld [vmem:[%s2 + $0x60] sm:$0xff]
      %v296 = vld [vmem:[%s2 + $0x68] sm:$0xff]
      %v297 = vld [vmem:[%s2 + $0x70] sm:$0xff]
      %v298 = vld [vmem:[%s2 + $0x78] sm:$0xff]
      %300 = vset.pattern.permute.xlu0 0
      %301 = vperm.xlu0 %300, %v283
      %v302 = vpop.permute.xlu0 %301
      %305 = vset.pattern.permute.xlu0 0
      %306 = vperm.xlu0 %305, %v284
      %v307 = vpop.permute.xlu0 %306
      %310 = vset.pattern.permute.xlu0 0
      %311 = vperm.xlu0 %310, %v285
      %v312 = vpop.permute.xlu0 %311
      %315 = vset.pattern.permute.xlu0 0
      %316 = vperm.xlu0 %315, %v286
      %v317 = vpop.permute.xlu0 %316
      %320 = vset.pattern.permute.xlu0 0
      %321 = vperm.xlu0 %320, %v287
      %v322 = vpop.permute.xlu0 %321
      %325 = vset.pattern.permute.xlu0 0
      %326 = vperm.xlu0 %325, %v288
      %v327 = vpop.permute.xlu0 %326
      %330 = vset.pattern.permute.xlu0 0
      %331 = vperm.xlu0 %330, %v289
      %v332 = vpop.permute.xlu0 %331
      %335 = vset.pattern.permute.xlu0 0
      %336 = vperm.xlu0 %335, %v290
      %v337 = vpop.permute.xlu0 %336
      %340 = vset.pattern.permute.xlu0 0
      %341 = vperm.xlu0 %340, %v291
      %v342 = vpop.permute.xlu0 %341
      %345 = vset.pattern.permute.xlu0 0
      %346 = vperm.xlu0 %345, %v292
      %v347 = vpop.permute.xlu0 %346
      %350 = vset.pattern.permute.xlu0 0
      %351 = vperm.xlu0 %350, %v293
      %v352 = vpop.permute.xlu0 %351
      %355 = vset.pattern.permute.xlu0 0
      %356 = vperm.xlu0 %355, %v294
      %v357 = vpop.permute.xlu0 %356
      %360 = vset.pattern.permute.xlu0 0
      %361 = vperm.xlu0 %360, %v295
      %v362 = vpop.permute.xlu0 %361
      %365 = vset.pattern.permute.xlu0 0
      %366 = vperm.xlu0 %365, %v296
      %v367 = vpop.permute.xlu0 %366
      %370 = vset.pattern.permute.xlu0 0
      %371 = vperm.xlu0 %370, %v297
      %v372 = vpop.permute.xlu0 %371
      %375 = vset.pattern.permute.xlu0 0
      %376 = vperm.xlu0 %375, %v298
      %v377 = vpop.permute.xlu0 %376
      %vm379 = vcmask 64512
      %v381 = vsel %vm379, %v266, 0
      %v384 = vsel %vm379, %v267, 0
      %v387 = vsel %vm379, %v268, 0
      %v390 = vsel %vm379, %v269, 0
      %v393 = vsel %vm379, %v270, 0
      %v396 = vsel %vm379, %v271, 0
      %v399 = vsel %vm379, %v272, 0
      %v402 = vsel %vm379, %v273, 0
      %v405 = vsel %vm379, %v274, 0
      %v408 = vsel %vm379, %v275, 0
      %v411 = vsel %vm379, %v276, 0
      %v414 = vsel %vm379, %v277, 0
      %v417 = vsel %vm379, %v278, 0
      %v420 = vsel %vm379, %v279, 0
      %v423 = vsel %vm379, %v280, 0
      %v426 = vsel %vm379, %v281, 0
      %428 = vmatprep.subr.mxu0 0.0
      %429 = vmatpush1.msra.mxu0 %v282
      %430 = vmatprep.subr.mxu0 0.0
      %431 = vmatpush1.msra.mxu0 0.0
      %432 = vmatprep.subr.mxu0 0.0
      %433 = vmatpush1.msra.mxu0 0.0
      %434 = vmatprep.subr.mxu0 0.0
      %435 = vmatpush1.msra.mxu0 0.0
      %436 = vmatprep.subr.mxu0 0.0
      %437 = vmatpush1.msra.mxu0 0.0
      %438 = vmatprep.subr.mxu0 0.0
      %439 = vmatpush1.msra.mxu0 0.0
      %440 = vmatprep.subr.mxu0 0.0
      %441 = vmatpush1.msra.mxu0 0.0
      %442 = vmatprep.subr.mxu0 0.0
      %443 = vmatpush1.msra.mxu0 0.0
      %444 = vmatprep.subr.mxu0 0.0
      %445 = vmatpush1.msra.mxu0 0.0
      %446 = vmatprep.subr.mxu0 0.0
      %447 = vmatpush1.msra.mxu0 0.0
      %448 = vmatprep.subr.mxu0 0.0
      %449 = vmatpush1.msra.mxu0 0.0
      %450 = vmatprep.subr.mxu0 0.0
      %451 = vmatpush1.msra.mxu0 0.0
      %452 = vmatprep.subr.mxu0 0.0
      %453 = vmatpush1.msra.mxu0 0.0
      %454 = vmatprep.subr.mxu0 0.0
      %455 = vmatpush1.msra.mxu0 0.0
      %456 = vmatprep.subr.mxu0 0.0
      %457 = vmatpush1.msra.mxu0 0.0
      %458 = vmatprep.subr.mxu0 0.0
      %459 = vmatpush1.msra.mxu0 0.0
      %460 = vmatprep.subr.mxu0 0.0
      %461 = vmatpush1.msra.mxu0 0.0
      %462 = vmatprep.subr.mxu0 0.0
      %463 = vmatpush1.msra.mxu0 0.0
      %464 = vmatprep.subr.mxu0 0.0
      %465 = vmatpush1.msra.mxu0 0.0
      %466 = vmatprep.subr.mxu0 0.0
      %467 = vmatpush1.msra.mxu0 0.0
      %468 = vmatprep.subr.mxu0 0.0
      %469 = vmatpush1.msra.mxu0 0.0
      %470 = vmatprep.subr.mxu0 0.0
      %471 = vmatpush1.msra.mxu0 0.0
      %472 = vmatprep.subr.mxu0 0.0
      %473 = vmatpush1.msra.mxu0 0.0
      %474 = vmatprep.subr.mxu0 0.0
      %475 = vmatpush1.msra.mxu0 0.0
      %476 = vmatprep.subr.mxu0 0.0
      %477 = vmatpush1.msra.mxu0 0.0
      %478 = vmatprep.subr.mxu0 0.0
      %479 = vmatpush1.msra.mxu0 0.0
      %480 = vmatprep.subr.mxu0 0.0
      %481 = vmatpush1.msra.mxu0 0.0
      %482 = vmatprep.subr.mxu0 0.0
      %483 = vmatpush1.msra.mxu0 0.0
      %484 = vmatprep.subr.mxu0 0.0
      %485 = vmatpush1.msra.mxu0 0.0
      %486 = vmatprep.subr.mxu0 0.0
      %487 = vmatpush1.msra.mxu0 0.0
      %488 = vmatprep.subr.mxu0 0.0
      %489 = vmatpush1.msra.mxu0 0.0
      %490 = vmatprep.subr.mxu0 0.0
      %491 = vmatpush1.msra.mxu0 0.0
      %492 = vmatprep.mubr.f32.mxu0 0.0
      %493 = vmatmul.mubr.f32.gmra.mrb[0].mxu0 %v381
      %v494 = vpop.f32.mrb[0].mxu0
      %v495 = vadd.f32 %v302, %v494
      %v496 = vpop.f32.mrb[0].mxu0
      %497 = vmatprep.mubr.f32.mxu0 0.0
      %498 = vmatmul.mubr.f32.gmra.mrb[0].mxu0 %v384
      %v499 = vpop.f32.mrb[0].mxu0
      %v500 = vadd.f32 %v307, %v499
      %v501 = vpop.f32.mrb[0].mxu0
      %502 = vmatprep.mubr.f32.mxu0 0.0
      %503 = vmatmul.mubr.f32.gmra.mrb[0].mxu0 %v387
      %v504 = vpop.f32.mrb[0].mxu0
      %v505 = vadd.f32 %v312, %v504
      %v506 = vpop.f32.mrb[0].mxu0
      %507 = vmatprep.mubr.f32.mxu0 0.0
      %508 = vmatmul.mubr.f32.gmra.mrb[0].mxu0 %v390
      %v509 = vpop.f32.mrb[0].mxu0
      %v510 = vadd.f32 %v317, %v509
      %v511 = vpop.f32.mrb[0].mxu0
      %512 = vmatprep.mubr.f32.mxu0 0.0
      %513 = vmatmul.mubr.f32.gmra.mrb[0].mxu0 %v393
      %v514 = vpop.f32.mrb[0].mxu0
      %v515 = vadd.f32 %v322, %v514
      %v516 = vpop.f32.mrb[0].mxu0
      %517 = vmatprep.mubr.f32.mxu0 0.0
      %518 = vmatmul.mubr.f32.gmra.mrb[0].mxu0 %v396
      %v519 = vpop.f32.mrb[0].mxu0
      %v520 = vadd.f32 %v327, %v519
      %v521 = vpop.f32.mrb[0].mxu0
      %522 = vmatprep.mubr.f32.mxu0 0.0
      %523 = vmatmul.mubr.f32.gmra.mrb[0].mxu0 %v399
      %v524 = vpop.f32.mrb[0].mxu0
      %v525 = vadd.f32 %v332, %v524
      %v526 = vpop.f32.mrb[0].mxu0
      %527 = vmatprep.mubr.f32.mxu0 0.0
      %528 = vmatmul.mubr.f32.gmra.mrb[0].mxu0 %v402
      %v529 = vpop.f32.mrb[0].mxu0
      %v530 = vadd.f32 %v337, %v529
      %v531 = vpop.f32.mrb[0].mxu0
      %532 = vmatprep.mubr.f32.mxu0 0.0
      %533 = vmatmul.mubr.f32.gmra.mrb[0].mxu0 %v405
      %v534 = vpop.f32.mrb[0].mxu0
      %v535 = vadd.f32 %v342, %v534
      %v536 = vpop.f32.mrb[0].mxu0
      %537 = vmatprep.mubr.f32.mxu0 0.0
      %538 = vmatmul.mubr.f32.gmra.mrb[0].mxu0 %v408
      %v539 = vpop.f32.mrb[0].mxu0
      %v540 = vadd.f32 %v347, %v539
      %v541 = vpop.f32.mrb[0].mxu0
      %542 = vmatprep.mubr.f32.mxu0 0.0
      %543 = vmatmul.mubr.f32.gmra.mrb[0].mxu0 %v411
      %v544 = vpop.f32.mrb[0].mxu0
      %v545 = vadd.f32 %v352, %v544
      %v546 = vpop.f32.mrb[0].mxu0
      %547 = vmatprep.mubr.f32.mxu0 0.0
      %548 = vmatmul.mubr.f32.gmra.mrb[0].mxu0 %v414
      %v549 = vpop.f32.mrb[0].mxu0
      %v550 = vadd.f32 %v357, %v549
      %v551 = vpop.f32.mrb[0].mxu0
      %552 = vmatprep.mubr.f32.mxu0 0.0
      %553 = vmatmul.mubr.f32.gmra.mrb[0].mxu0 %v417
      %v554 = vpop.f32.mrb[0].mxu0
      %v555 = vadd.f32 %v362, %v554
      %v556 = vpop.f32.mrb[0].mxu0
      %557 = vmatprep.mubr.f32.mxu0 0.0
      %558 = vmatmul.mubr.f32.gmra.mrb[0].mxu0 %v420
      %v559 = vpop.f32.mrb[0].mxu0
      %v560 = vadd.f32 %v367, %v559
      %v561 = vpop.f32.mrb[0].mxu0
      %562 = vmatprep.mubr.f32.mxu0 0.0
      %563 = vmatmul.mubr.f32.gmra.mrb[0].mxu0 %v423
      %v564 = vpop.f32.mrb[0].mxu0
      %v565 = vadd.f32 %v372, %v564
      %v566 = vpop.f32.mrb[0].mxu0
      %567 = vmatprep.mubr.f32.mxu0 0.0
      %568 = vmatmul.mubr.f32.gmra.mrb[0].mxu0 %v426
      %v569 = vpop.f32.mrb[0].mxu0
      %v570 = vadd.f32 %v377, %v569
      %v571 = vpop.f32.mrb[0].mxu0
      %572 = vdwg.mxu0
      %v573 = vmax.f32 %v495, 0.0
      %v574 = vmax.f32 %v500, 0.0
      %v575 = vmax.f32 %v505, 0.0
      %v576 = vmax.f32 %v510, 0.0
      %v577 = vmax.f32 %v515, 0.0
      %v578 = vmax.f32 %v520, 0.0
      %v579 = vmax.f32 %v525, 0.0
      %v580 = vmax.f32 %v530, 0.0
      %v581 = vmax.f32 %v535, 0.0
      %v582 = vmax.f32 %v540, 0.0
      %v583 = vmax.f32 %v545, 0.0
      %v584 = vmax.f32 %v550, 0.0
      %v585 = vmax.f32 %v555, 0.0
      %v586 = vmax.f32 %v560, 0.0
      %v587 = vmax.f32 %v565, 0.0
      %v588 = vmax.f32 %v570, 0.0
      %v589 = vld [vmem:[#allocation2] sm:$0xff]
      %v590 = vld [vmem:[#allocation2 + $0x8] sm:$0xff]
      %v591 = vld [vmem:[#allocation2 + $0x10] sm:$0xff]
      %v592 = vld [vmem:[#allocation2 + $0x18] sm:$0xff]
      %v593 = vld [vmem:[#allocation2 + $0x20] sm:$0xff]
      %v594 = vld [vmem:[#allocation2 + $0x28] sm:$0xff]
      %v595 = vld [vmem:[#allocation2 + $0x30] sm:$0xff]
      %v596 = vld [vmem:[#allocation2 + $0x38] sm:$0xff]
      %v597 = vld [vmem:[#allocation2 + $0x40] sm:$0xff]
      %v598 = vld [vmem:[#allocation2 + $0x48] sm:$0xff]
      %v599 = vld [vmem:[#allocation2 + $0x50] sm:$0xff]
      %v600 = vld [vmem:[#allocation2 + $0x58] sm:$0xff]
      %v601 = vld [vmem:[#allocation2 + $0x60] sm:$0xff]
      %v602 = vld [vmem:[#allocation2 + $0x68] sm:$0xff]
      %v603 = vld [vmem:[#allocation2 + $0x70] sm:$0xff]
      %v604 = vld [vmem:[#allocation2 + $0x78] sm:$0xff]
      %605 = vmax.xlane.f32.xlu0 %v573
      %v606 = vpop.xlane.xlu0 %605
      %607 = vmax.xlane.f32.xlu0 %v574
      %v608 = vpop.xlane.xlu0 %607
      %609 = vmax.xlane.f32.xlu0 %v575
      %v610 = vpop.xlane.xlu0 %609
      %611 = vmax.xlane.f32.xlu0 %v576
      %v612 = vpop.xlane.xlu0 %611
      %613 = vmax.xlane.f32.xlu0 %v577
      %v614 = vpop.xlane.xlu0 %613
      %615 = vmax.xlane.f32.xlu0 %v578
      %v616 = vpop.xlane.xlu0 %615
      %617 = vmax.xlane.f32.xlu0 %v579
      %v618 = vpop.xlane.xlu0 %617
      %619 = vmax.xlane.f32.xlu0 %v580
      %v620 = vpop.xlane.xlu0 %619
      %621 = vmax.xlane.f32.xlu0 %v581
      %v622 = vpop.xlane.xlu0 %621
      %623 = vmax.xlane.f32.xlu0 %v582
      %v624 = vpop.xlane.xlu0 %623
      %625 = vmax.xlane.f32.xlu0 %v583
      %v626 = vpop.xlane.xlu0 %625
      %627 = vmax.xlane.f32.xlu0 %v584
      %v628 = vpop.xlane.xlu0 %627
      %629 = vmax.xlane.f32.xlu0 %v585
      %v630 = vpop.xlane.xlu0 %629
      %631 = vmax.xlane.f32.xlu0 %v586
      %v632 = vpop.xlane.xlu0 %631
      %633 = vmax.xlane.f32.xlu0 %v587
      %v634 = vpop.xlane.xlu0 %633
      %635 = vmax.xlane.f32.xlu0 %v588
      %v636 = vpop.xlane.xlu0 %635
      %v637 = vmax.f32 %v589, %v606
      %v638 = vmax.f32 %v590, %v608
      %v639 = vmax.f32 %v591, %v610
      %v640 = vmax.f32 %v592, %v612
      %v641 = vmax.f32 %v593, %v614
      %v642 = vmax.f32 %v594, %v616
      %v643 = vmax.f32 %v595, %v618
      %v644 = vmax.f32 %v596, %v620
      %v645 = vmax.f32 %v597, %v622
      %v646 = vmax.f32 %v598, %v624
      %v647 = vmax.f32 %v599, %v626
      %v648 = vmax.f32 %v600, %v628
      %v649 = vmax.f32 %v601, %v630
      %v650 = vmax.f32 %v602, %v632
      %v651 = vmax.f32 %v603, %v634
      %v652 = vmax.f32 %v604, %v636
      %vm653 = vcmask 7168
      %654 = vst.msk [vmem:[#allocation2] sm:$0xff] %vm653, %v637
      %655 = vst.msk [vmem:[#allocation2 + $0x8] sm:$0xff] %vm653, %v638
      %656 = vst.msk [vmem:[#allocation2 + $0x10] sm:$0xff] %vm653, %v639
      %657 = vst.msk [vmem:[#allocation2 + $0x18] sm:$0xff] %vm653, %v640
      %658 = vst.msk [vmem:[#allocation2 + $0x20] sm:$0xff] %vm653, %v641
      %659 = vst.msk [vmem:[#allocation2 + $0x28] sm:$0xff] %vm653, %v642
      %660 = vst.msk [vmem:[#allocation2 + $0x30] sm:$0xff] %vm653, %v643
      %661 = vst.msk [vmem:[#allocation2 + $0x38] sm:$0xff] %vm653, %v644
      %662 = vst.msk [vmem:[#allocation2 + $0x40] sm:$0xff] %vm653, %v645
      %663 = vst.msk [vmem:[#allocation2 + $0x48] sm:$0xff] %vm653, %v646
      %664 = vst.msk [vmem:[#allocation2 + $0x50] sm:$0xff] %vm653, %v647
      %665 = vst.msk [vmem:[#allocation2 + $0x58] sm:$0xff] %vm653, %v648
      %666 = vst.msk [vmem:[#allocation2 + $0x60] sm:$0xff] %vm653, %v649
      %667 = vst.msk [vmem:[#allocation2 + $0x68] sm:$0xff] %vm653, %v650
      %668 = vst.msk [vmem:[#allocation2 + $0x70] sm:$0xff] %vm653, %v651
      %669 = vst.msk [vmem:[#allocation2 + $0x78] sm:$0xff] %vm653, %v652
      // Predicated region
      $region45: #{tpu_custom_call.1} parent=39 // pred_check
        %p670 = pneg %p245
      $region46: #{tpu_custom_call.1} parent=39 // pred_check_branch
        %672 = sbr.rel (%p670) target = $region48
      $region47: #{tpu_custom_call.1} parent=39 // pred_region
        %v673 = vld [vmem:[%s3] sm:$0xff]
        %v674 = vld [vmem:[%s3 + $0x8] sm:$0xff]
        %v675 = vld [vmem:[%s3 + $0x10] sm:$0xff]
        %v676 = vld [vmem:[%s3 + $0x18] sm:$0xff]
        %v677 = vld [vmem:[%s3 + $0x20] sm:$0xff]
        %v678 = vld [vmem:[%s3 + $0x28] sm:$0xff]
        %v679 = vld [vmem:[%s3 + $0x30] sm:$0xff]
        %v680 = vld [vmem:[%s3 + $0x38] sm:$0xff]
        %v681 = vld [vmem:[%s3 + $0x40] sm:$0xff]
        %v682 = vld [vmem:[%s3 + $0x48] sm:$0xff]
        %v683 = vld [vmem:[%s3 + $0x50] sm:$0xff]
        %v684 = vld [vmem:[%s3 + $0x58] sm:$0xff]
        %v685 = vld [vmem:[%s3 + $0x60] sm:$0xff]
        %v686 = vld [vmem:[%s3 + $0x68] sm:$0xff]
        %v687 = vld [vmem:[%s3 + $0x70] sm:$0xff]
        %v688 = vld [vmem:[%s3 + $0x78] sm:$0xff]
        %v689 = vld [vmem:[#allocation2] sm:$0xff]
        %v690 = vld [vmem:[#allocation2 + $0x8] sm:$0xff]
        %v691 = vld [vmem:[#allocation2 + $0x10] sm:$0xff]
        %v692 = vld [vmem:[#allocation2 + $0x18] sm:$0xff]
        %v693 = vld [vmem:[#allocation2 + $0x20] sm:$0xff]
        %v694 = vld [vmem:[#allocation2 + $0x28] sm:$0xff]
        %v695 = vld [vmem:[#allocation2 + $0x30] sm:$0xff]
        %v696 = vld [vmem:[#allocation2 + $0x38] sm:$0xff]
        %v697 = vld [vmem:[#allocation2 + $0x40] sm:$0xff]
        %v698 = vld [vmem:[#allocation2 + $0x48] sm:$0xff]
        %v699 = vld [vmem:[#allocation2 + $0x50] sm:$0xff]
        %v700 = vld [vmem:[#allocation2 + $0x58] sm:$0xff]
        %v701 = vld [vmem:[#allocation2 + $0x60] sm:$0xff]
        %v702 = vld [vmem:[#allocation2 + $0x68] sm:$0xff]
        %v703 = vld [vmem:[#allocation2 + $0x70] sm:$0xff]
        %v704 = vld [vmem:[#allocation2 + $0x78] sm:$0xff]
        %v705 = vld [vmem:[%s4] sm:$0xff]
        %v706 = vld [vmem:[%s4 + $0x8] sm:$0xff]
        %v707 = vld [vmem:[%s4 + $0x10] sm:$0xff]
        %v708 = vld [vmem:[%s4 + $0x18] sm:$0xff]
        %v709 = vld [vmem:[%s4 + $0x20] sm:$0xff]
        %v710 = vld [vmem:[%s4 + $0x28] sm:$0xff]
        %v711 = vld [vmem:[%s4 + $0x30] sm:$0xff]
        %v712 = vld [vmem:[%s4 + $0x38] sm:$0xff]
        %v713 = vld [vmem:[%s4 + $0x40] sm:$0xff]
        %v714 = vld [vmem:[%s4 + $0x48] sm:$0xff]
        %v715 = vld [vmem:[%s4 + $0x50] sm:$0xff]
        %v716 = vld [vmem:[%s4 + $0x58] sm:$0xff]
        %v717 = vld [vmem:[%s4 + $0x60] sm:$0xff]
        %v718 = vld [vmem:[%s4 + $0x68] sm:$0xff]
        %v719 = vld [vmem:[%s4 + $0x70] sm:$0xff]
        %v720 = vld [vmem:[%s4 + $0x78] sm:$0xff]
        %721 = vmatprep.subr.mxu0 0.0
        %722 = vmatpush1.msra.mxu0 %v689
        %723 = vmatprep.subr.mxu0 0.0
        %724 = vmatpush1.msra.mxu0 %v690
        %725 = vmatprep.subr.mxu0 0.0
        %726 = vmatpush1.msra.mxu0 %v691
        %727 = vmatprep.subr.mxu0 0.0
        %728 = vmatpush1.msra.mxu0 %v692
        %729 = vmatprep.subr.mxu0 0.0
        %730 = vmatpush1.msra.mxu0 %v693
        %731 = vmatprep.subr.mxu0 0.0
        %732 = vmatpush1.msra.mxu0 %v694
        %733 = vmatprep.subr.mxu0 0.0
        %734 = vmatpush1.msra.mxu0 %v695
        %735 = vmatprep.subr.mxu0 0.0
        %736 = vmatpush1.msra.mxu0 %v696
        %737 = vmatprep.subr.mxu0 0.0
        %738 = vmatpush1.msra.mxu0 %v697
        %739 = vmatprep.subr.mxu0 0.0
        %740 = vmatpush1.msra.mxu0 %v698
        %741 = vmatprep.subr.mxu0 0.0
        %742 = vmatpush1.msra.mxu0 %v699
        %743 = vmatprep.subr.mxu0 0.0
        %744 = vmatpush1.msra.mxu0 %v700
        %745 = vmatprep.subr.mxu0 0.0
        %746 = vmatpush1.msra.mxu0 %v701
        %747 = vmatprep.subr.mxu0 0.0
        %748 = vmatpush1.msra.mxu0 %v702
        %749 = vmatprep.subr.mxu0 0.0
        %750 = vmatpush1.msra.mxu0 %v703
        %751 = vmatprep.subr.mxu0 0.0
        %752 = vmatpush1.msra.mxu0 %v704
        %753 = vmatprep.subr.mxu0 0.0
        %754 = vmatpush1.msra.mxu0 0.0
        %755 = vmatprep.subr.mxu0 0.0
        %756 = vmatpush1.msra.mxu0 0.0
        %757 = vmatprep.subr.mxu0 0.0
        %758 = vmatpush1.msra.mxu0 0.0
        %759 = vmatprep.subr.mxu0 0.0
        %760 = vmatpush1.msra.mxu0 0.0
        %761 = vmatprep.subr.mxu0 0.0
        %762 = vmatpush1.msra.mxu0 0.0
        %763 = vmatprep.subr.mxu0 0.0
        %764 = vmatpush1.msra.mxu0 0.0
        %765 = vmatprep.subr.mxu0 0.0
        %766 = vmatpush1.msra.mxu0 0.0
        %767 = vmatprep.subr.mxu0 0.0
        %768 = vmatpush1.msra.mxu0 0.0
        %769 = vmatprep.subr.mxu0 0.0
        %770 = vmatpush1.msra.mxu0 0.0
        %771 = vmatprep.subr.mxu0 0.0
        %772 = vmatpush1.msra.mxu0 0.0
        %773 = vmatprep.subr.mxu0 0.0
        %774 = vmatpush1.msra.mxu0 0.0
        %775 = vmatprep.subr.mxu0 0.0
        %776 = vmatpush1.msra.mxu0 0.0
        %777 = vmatprep.subr.mxu0 0.0
        %778 = vmatpush1.msra.mxu0 0.0
        %779 = vmatprep.subr.mxu0 0.0
        %780 = vmatpush1.msra.mxu0 0.0
        %781 = vmatprep.subr.mxu0 0.0
        %782 = vmatpush1.msra.mxu0 0.0
        %783 = vmatprep.subr.mxu0 0.0
        %784 = vmatpush1.msra.mxu0 0.0
        %785 = vmatprep.mubr.f32.mxu0 0.0
        %786 = vmatmul.mubr.f32.gmra.mrb[0].mxu0 %v673
        %v787 = vpop.f32.mrb[0].mxu0
        %v788 = vadd.f32 %v705, %v787
        %v789 = vpop.f32.mrb[0].mxu0
        %790 = vmatprep.mubr.f32.mxu0 0.0
        %791 = vmatmul.mubr.f32.gmra.mrb[0].mxu0 %v674
        %v792 = vpop.f32.mrb[0].mxu0
        %v793 = vadd.f32 %v706, %v792
        %v794 = vpop.f32.mrb[0].mxu0
        %795 = vmatprep.mubr.f32.mxu0 0.0
        %796 = vmatmul.mubr.f32.gmra.mrb[0].mxu0 %v675
        %v797 = vpop.f32.mrb[0].mxu0
        %v798 = vadd.f32 %v707, %v797
        %v799 = vpop.f32.mrb[0].mxu0
        %800 = vmatprep.mubr.f32.mxu0 0.0
        %801 = vmatmul.mubr.f32.gmra.mrb[0].mxu0 %v676
        %v802 = vpop.f32.mrb[0].mxu0
        %v803 = vadd.f32 %v708, %v802
        %v804 = vpop.f32.mrb[0].mxu0
        %805 = vmatprep.mubr.f32.mxu0 0.0
        %806 = vmatmul.mubr.f32.gmra.mrb[0].mxu0 %v677
        %v807 = vpop.f32.mrb[0].mxu0
        %v808 = vadd.f32 %v709, %v807
        %v809 = vpop.f32.mrb[0].mxu0
        %810 = vmatprep.mubr.f32.mxu0 0.0
        %811 = vmatmul.mubr.f32.gmra.mrb[0].mxu0 %v678
        %v812 = vpop.f32.mrb[0].mxu0
        %v813 = vadd.f32 %v710, %v812
        %v814 = vpop.f32.mrb[0].mxu0
        %815 = vmatprep.mubr.f32.mxu0 0.0
        %816 = vmatmul.mubr.f32.gmra.mrb[0].mxu0 %v679
        %v817 = vpop.f32.mrb[0].mxu0
        %v818 = vadd.f32 %v711, %v817
        %v819 = vpop.f32.mrb[0].mxu0
        %820 = vmatprep.mubr.f32.mxu0 0.0
        %821 = vmatmul.mubr.f32.gmra.mrb[0].mxu0 %v680
        %v822 = vpop.f32.mrb[0].mxu0
        %v823 = vadd.f32 %v712, %v822
        %v824 = vpop.f32.mrb[0].mxu0
        %825 = vmatprep.mubr.f32.mxu0 0.0
        %826 = vmatmul.mubr.f32.gmra.mrb[0].mxu0 %v681
        %v827 = vpop.f32.mrb[0].mxu0
        %v828 = vadd.f32 %v713, %v827
        %v829 = vpop.f32.mrb[0].mxu0
        %830 = vmatprep.mubr.f32.mxu0 0.0
        %831 = vmatmul.mubr.f32.gmra.mrb[0].mxu0 %v682
        %v832 = vpop.f32.mrb[0].mxu0
        %v833 = vadd.f32 %v714, %v832
        %v834 = vpop.f32.mrb[0].mxu0
        %835 = vmatprep.mubr.f32.mxu0 0.0
        %836 = vmatmul.mubr.f32.gmra.mrb[0].mxu0 %v683
        %v837 = vpop.f32.mrb[0].mxu0
        %v838 = vadd.f32 %v715, %v837
        %v839 = vpop.f32.mrb[0].mxu0
        %840 = vmatprep.mubr.f32.mxu0 0.0
        %841 = vmatmul.mubr.f32.gmra.mrb[0].mxu0 %v684
        %v842 = vpop.f32.mrb[0].mxu0
        %v843 = vadd.f32 %v716, %v842
        %v844 = vpop.f32.mrb[0].mxu0
        %845 = vmatprep.mubr.f32.mxu0 0.0
        %846 = vmatmul.mubr.f32.gmra.mrb[0].mxu0 %v685
        %v847 = vpop.f32.mrb[0].mxu0
        %v848 = vadd.f32 %v717, %v847
        %v849 = vpop.f32.mrb[0].mxu0
        %850 = vmatprep.mubr.f32.mxu0 0.0
        %851 = vmatmul.mubr.f32.gmra.mrb[0].mxu0 %v686
        %v852 = vpop.f32.mrb[0].mxu0
        %v853 = vadd.f32 %v718, %v852
        %v854 = vpop.f32.mrb[0].mxu0
        %855 = vmatprep.mubr.f32.mxu0 0.0
        %856 = vmatmul.mubr.f32.gmra.mrb[0].mxu0 %v687
        %v857 = vpop.f32.mrb[0].mxu0
        %v858 = vadd.f32 %v719, %v857
        %v859 = vpop.f32.mrb[0].mxu0
        %860 = vmatprep.mubr.f32.mxu0 0.0
        %861 = vmatmul.mubr.f32.gmra.mrb[0].mxu0 %v688
        %v862 = vpop.f32.mrb[0].mxu0
        %v863 = vadd.f32 %v720, %v862
        %v864 = vpop.f32.mrb[0].mxu0
        %865 = vdwg.mxu0
        %866 = vst.msk [vmem:[%s244] sm:$0xff] %vm653, %v788
        %867 = vst.msk [vmem:[%s244 + $0x8] sm:$0xff] %vm653, %v793
        %868 = vst.msk [vmem:[%s244 + $0x10] sm:$0xff] %vm653, %v798
        %869 = vst.msk [vmem:[%s244 + $0x18] sm:$0xff] %vm653, %v803
        %870 = vst.msk [vmem:[%s244 + $0x20] sm:$0xff] %vm653, %v808
        %871 = vst.msk [vmem:[%s244 + $0x28] sm:$0xff] %vm653, %v813
        %872 = vst.msk [vmem:[%s244 + $0x30] sm:$0xff] %vm653, %v818
        %873 = vst.msk [vmem:[%s244 + $0x38] sm:$0xff] %vm653, %v823
        %874 = vst.msk [vmem:[%s244 + $0x40] sm:$0xff] %vm653, %v828
        %875 = vst.msk [vmem:[%s244 + $0x48] sm:$0xff] %vm653, %v833
        %876 = vst.msk [vmem:[%s244 + $0x50] sm:$0xff] %vm653, %v838
        %877 = vst.msk [vmem:[%s244 + $0x58] sm:$0xff] %vm653, %v843
        %878 = vst.msk [vmem:[%s244 + $0x60] sm:$0xff] %vm653, %v848
        %879 = vst.msk [vmem:[%s244 + $0x68] sm:$0xff] %vm653, %v853
        %880 = vst.msk [vmem:[%s244 + $0x70] sm:$0xff] %vm653, %v858
        %881 = vst.msk [vmem:[%s244 + $0x78] sm:$0xff] %vm653, %v863
      $region48: #{tpu_custom_call.1} parent=39 // pred_fallthru
        _
      %p882 = scmp.lt.s32.totalorder %s20, 1
      %s883 = scalar_select %p882, %s20, 1
      %s884 = smul.addr %s883, 16
      %s885 = smul.addr %s884, 8
      %s886 = scalar_lea.vmem %s5, %s885
      // Predicated region
      $region49: #{tpu_custom_call.1} parent=39 // pred_check
        %p887 = pneg %p158
      $region50: #{tpu_custom_call.1} parent=39 // pred_check_branch
        %889 = sbr.rel (%p887) target = $region52
      $region51: #{tpu_custom_call.1} parent=39 // pred_region
        _
      $region52: #{tpu_custom_call.1} parent=39 // pred_fallthru
        _
    $region40: #{tpu_custom_call.1} parent=5 // pred_fallthru
      _
    %p890 = scmp.le.s32.totalorder 2, %s11
    // Predicated region
    $region53: #{tpu_custom_call.1} parent=5 // pred_check
      %p891 = pneg %p890
    $region54: #{tpu_custom_call.1} parent=5 // pred_check_branch
      %893 = sbr.rel (%p891) target = $region56
    $region55: #{tpu_custom_call.1} parent=5 // pred_region
      %s894 = ssub.s32 %s11, 2
      // Predicated region
      $region57: #{tpu_custom_call.1} parent=55 // pred_check
        %p895 = pneg %p164
      $region58: #{tpu_custom_call.1} parent=55 // pred_check_branch
        %897 = sbr.rel (%p895) target = $region60
      $region59: #{tpu_custom_call.1} parent=55 // pred_region
        %p898 = scmp.lt.s32.totalorder %s22, 1
        %s899 = scalar_select %p898, %s22, 1
        %s900 = smul.addr %s899, 16
        %s901 = smul.addr %s900, 8
        %s902 = scalar_lea.vmem %s5, %s901
      $region60: #{tpu_custom_call.1} parent=55 // pred_fallthru
        _
    $region56: #{tpu_custom_call.1} parent=5 // pred_fallthru
      _
  $region6: #{tpu_custom_call.1} parent=0 // loop_footer
    %s15 = sadd.s32 1, %s11
  $region7: #{tpu_custom_call.1} parent=0 // loop_footer_branch
    %10 = sbr.rel target = $region3
  $region8: #{tpu_custom_call.1} parent=0 // loop_exit
    _

</llo_original>
